<compile_context>
chip_gen: v5e
topology: v5e:2x2
jax: 0.10.0
libtpu: 0.0.40
codegen_flags: <defaults>
</compile_context>

<pallas_src>
import functools

import numpy as np

import jax
import jax.numpy as jnp
from jax.experimental import pallas as pl
from jax.experimental.pallas import tpu as pltpu

# ---------------------------------------------------------------------------
# Vocab / tokenization glue (host-side, as in the PyTorch module).
# ---------------------------------------------------------------------------
VOCAB = ['[PAD]', '[UNK]', 'This', 'is', 'a', 'sample', 'sentence']
TOKEN_TO_IDX = {token: idx for idx, token in enumerate(VOCAB)}
EMBEDDING_DIM = 128
PAD_IDX = TOKEN_TO_IDX['[PAD]']


def sentence_to_tokens(sentence):
    return sentence.split()


def tokens_to_indices(tokens):
    return [TOKEN_TO_IDX.get(t, TOKEN_TO_IDX['[UNK]']) for t in tokens]


# ---------------------------------------------------------------------------
# Helpers.
# ---------------------------------------------------------------------------
def _rows_per_block(itemsize):
    # Full sublane tile: 8 rows for 4-byte dtypes, 16 for bf16, 32 for int8.
    return max(8, 32 // int(itemsize))


def _vmem_budget_bytes():
    # Generation-aware VMEM budget (v5e/v6e: 128 MiB, v7x: 64 MiB per TC).
    try:
        return int(pltpu.get_tpu_info().vmem_capacity_bytes)
    except Exception:
        return 64 << 20  # conservative fallback (v7x per-TensorCore VMEM)


# ---------------------------------------------------------------------------
# Kernel bodies.
# ---------------------------------------------------------------------------
def _resident_gather_kernel(idx_ref, table_ref, out_ref, *, rows):
    # idx_ref  : (seq_padded,) int32 in SMEM (scalar prefetch)
    # table_ref: (V, D) full table, VMEM-resident (constant index_map)
    # out_ref  : (rows, D) aligned output block for this grid step
    base = pl.program_id(0) * rows
    for r in range(rows):  # static unroll
        idx = idx_ref[base + r]
        out_ref[pl.ds(r, 1), :] = table_ref[pl.ds(idx, 1), :]


def _dma_gather_kernel(idx_ref, table_hbm, out_ref, rows_vmem, sems, *, rows):
    # idx_ref  : (seq_padded,) int32 in SMEM (scalar prefetch)
    # table_hbm: (V, D) table left in HBM (memory_space=pl.ANY)
    # out_ref  : (rows, D) aligned output block
    # rows_vmem: (rows, D) VMEM scratch
    # sems     : (rows,) DMA semaphores (one per in-flight row copy)
    base = pl.program_id(0) * rows
    copies = []
    for r in range(rows):  # issue all row DMAs, keep them in flight
        idx = idx_ref[base + r]
        cp = pltpu.make_async_copy(
            table_hbm.at[pl.ds(idx, 1), :],
            rows_vmem.at[pl.ds(r, 1), :],
            sems.at[r],
        )
        cp.start()
        copies.append(cp)
    for cp in copies:
        cp.wait()
    out_ref[...] = rows_vmem[...]


# ---------------------------------------------------------------------------
# pallas_call builder (cached per static shape bucket).
# ---------------------------------------------------------------------------
@functools.lru_cache(maxsize=None)
def _build_gather(seq_padded, vocab_size, embedding_dim, dtype_name, rows,
                  resident, vmem_budget):
    dtype = jnp.dtype(dtype_name)
    itemsize = dtype.itemsize
    table_bytes = vocab_size * embedding_dim * itemsize
    num_blocks = seq_padded // rows

    out_shape = jax.ShapeDtypeStruct((seq_padded, embedding_dim), dtype)
    out_spec = pl.BlockSpec((rows, embedding_dim), lambda i, idx_ref: (i, 0))

    cost = pl.CostEstimate(
        flops=0,
        transcendentals=0,
        bytes_accessed=(2 * seq_padded * embedding_dim * itemsize
                        + (table_bytes if resident else 0)),
    )
    # Leave headroom: enough for a (double-buffered) resident table + blocks.
    vmem_limit = int(min(0.75 * vmem_budget,
                         max(32 << 20, 2 * table_bytes + (8 << 20))))

    if resident:
        kernel = functools.partial(_resident_gather_kernel, rows=rows)
        in_specs = [
            # Full-array block, constant index_map -> one bulk DMA, table
            # stays resident in VMEM across the whole grid.
            pl.BlockSpec((vocab_size, embedding_dim),
                         lambda i, idx_ref: (0, 0)),
        ]
        scratch_shapes = []
    else:
        kernel = functools.partial(_dma_gather_kernel, rows=rows)
        in_specs = [pl.BlockSpec(memory_space=pl.ANY)]  # raw HBM ref
        scratch_shapes = [
            pltpu.VMEM((rows, embedding_dim), dtype),
            pltpu.SemaphoreType.DMA((rows,)),
        ]

    grid_spec = pltpu.PrefetchScalarGridSpec(
        num_scalar_prefetch=1,
        grid=(num_blocks,),
        in_specs=in_specs,
        out_specs=out_spec,
        scratch_shapes=scratch_shapes,
    )
    fn = pl.pallas_call(
        kernel,
        out_shape=out_shape,
        grid_spec=grid_spec,
        compiler_params=pltpu.CompilerParams(
            # seq blocks are independent -> shards across v7x's 2 TCs;
            # no-op on v5e/v6e.
            dimension_semantics=("parallel",),
            vmem_limit_bytes=vmem_limit,
        ),
        cost_estimate=cost,
    )
    return jax.jit(fn)


# ---------------------------------------------------------------------------
# Public lookup.
# ---------------------------------------------------------------------------
def embedding_lookup(indices, table, *, force_pallas=False,
                     max_resident_table_bytes=None):
    """indices: (seq,) ints -> (1, seq, D) gathered embeddings."""
    V, D = table.shape
    itemsize = jnp.dtype(table.dtype).itemsize
    table_bytes = V * D * itemsize

    # Host-side index prep (single contiguous int32 buffer, no device ops).
    idx_host = np.asarray(indices, dtype=np.int64).reshape(-1)
    seq = int(idx_host.shape[0])
    idx_host = np.clip(idx_host, 0, V - 1).astype(np.int32)

    # Tiny-problem fast path: a single XLA gather beats Pallas fixed costs.
    if not force_pallas and (table_bytes <= (64 << 10)
                             or seq * D * itemsize <= (64 << 10)):
        return table[jnp.asarray(idx_host)][None]

    rows = _rows_per_block(itemsize)
    seq_padded = max(rows, ((seq + rows - 1) // rows) * rows)
    idx_padded = np.zeros((seq_padded,), dtype=np.int32)
    idx_padded[:seq] = idx_host  # tail rows gather row 0, sliced off below

    budget = _vmem_budget_bytes()
    if max_resident_table_bytes is None:
        # Resident copy may be double-buffered -> cap table at budget/8 so the
        # footprint stays <= budget/4 (16 MiB on v7x, 32 MiB on v5e/v6e).
        max_resident_table_bytes = budget // 8
    resident = table_bytes <= max_resident_table_bytes

    fn = _build_gather(seq_padded, V, D, str(jnp.dtype(table.dtype)), rows,
                       resident, budget)
    out = fn(jnp.asarray(idx_padded), table)  # (seq_padded, D)
    return out[:seq][None]                    # (1, seq, D)


# ---------------------------------------------------------------------------
# Module equivalent.
# ---------------------------------------------------------------------------
class EmbeddingLayer:
    """JAX/Pallas equivalent of the PyTorch EmbeddingLayer module."""

    def __init__(self, vocab_size, embedding_dim, key):
        # nn.Embedding default init: weight ~ N(0, 1)
        self.weight = jax.random.normal(
            key, (vocab_size, embedding_dim), dtype=jnp.float32)

    def __call__(self, tokens, *, force_pallas=False):
        indices = tokens_to_indices(tokens)
        return embedding_lookup(indices, self.weight,
                                force_pallas=force_pallas)


if __name__ == "__main__":
    key = jax.random.PRNGKey(0)
    layer = EmbeddingLayer(len(VOCAB), EMBEDDING_DIM, key)

    sentence = 'This is a sample sentence'
    tokens = sentence_to_tokens(sentence)
    indices = tokens_to_indices(tokens)
    ref = layer.weight[jnp.asarray(indices, dtype=jnp.int32)][None]

    # 1) Default path (tiny shapes -> plain-JAX gather fast path).
    emb_default = jax.block_until_ready(layer(tokens))

    # 2) Pallas kernel: VMEM-resident-table gather (the fast path at this size).
    emb_resident = jax.block_until_ready(
        embedding_lookup(indices, layer.weight, force_pallas=True))

    # 3) Pallas kernel: manual multi-DMA HBM row gather (large-table path,
    #    forced here by disabling the resident-table threshold).
    emb_dma = jax.block_until_ready(
        embedding_lookup(indices, layer.weight, force_pallas=True,
                         max_resident_table_bytes=0))

    for name, emb in (("default", emb_default),
                      ("resident", emb_resident),
                      ("dma", emb_dma)):
        assert emb.shape == (1, len(tokens), EMBEDDING_DIM), (name, emb.shape)
        assert emb.dtype == jnp.float32, (name, emb.dtype)
        assert jnp.allclose(emb, ref, atol=1e-6), f"mismatch vs reference ({name})"

    print("KERNEL_OK")
</pallas_src>

<mosaic_0001>
module attributes {stable_mosaic.version = 11 : i64} {
  func.func @_resident_gather_kernel(%arg0: i32, %arg1: memref<8xi32, #tpu.memory_space<smem>>, %arg2: memref<7x128xf32, #tpu.memory_space<vmem>>, %arg3: memref<8x128xf32, #tpu.memory_space<vmem>>) attributes {dimension_semantics = [#tpu.dimension_semantics<parallel>], iteration_bounds = array<i64: 1>, scalar_prefetch = 1 : i64, scratch_operands = 0 : i64, tpu.core_type = #tpu.core_type<tc>, window_params = [{pipeline_mode = #tpu.pipeline_mode<synchronous>, transform_indices = @transform_0, window_bounds = array<i64: 7, 128>}, {transform_indices = @transform_1, window_bounds = array<i64: 8, 128>}]} {
    %c8_i32 = arith.constant 8 : i32
    %0 = arith.muli %arg0, %c8_i32 : i32
    %c0_i32 = arith.constant 0 : i32
    %1 = arith.addi %0, %c0_i32 : i32
    %2 = arith.index_cast %1 : i32 to index
    %3 = memref.load %arg1[%2] : memref<8xi32, #tpu.memory_space<smem>>
    %4 = arith.index_cast %3 : i32 to index
    %c0 = arith.constant 0 : index
    %5 = vector.load %arg2[%4, %c0] : memref<7x128xf32, #tpu.memory_space<vmem>>, vector<1x128xf32>
    %c0_0 = arith.constant 0 : index
    %c0_1 = arith.constant 0 : index
    %6 = vector.load %arg3[%c0_0, %c0_1] : memref<8x128xf32, #tpu.memory_space<vmem>>, vector<1x128xf32>
    tpu.vector_store %arg3[%c0_0, %c0_1], %5 {strides = array<i32>} : memref<8x128xf32, #tpu.memory_space<vmem>>, vector<1x128xf32>,
    %c1_i32 = arith.constant 1 : i32
    %7 = arith.addi %0, %c1_i32 : i32
    %8 = arith.index_cast %7 : i32 to index
    %9 = memref.load %arg1[%8] : memref<8xi32, #tpu.memory_space<smem>>
    %10 = arith.index_cast %9 : i32 to index
    %c0_2 = arith.constant 0 : index
    %11 = vector.load %arg2[%10, %c0_2] : memref<7x128xf32, #tpu.memory_space<vmem>>, vector<1x128xf32>
    %c1 = arith.constant 1 : index
    %c0_3 = arith.constant 0 : index
    %12 = vector.load %arg3[%c1, %c0_3] : memref<8x128xf32, #tpu.memory_space<vmem>>, vector<1x128xf32>
    tpu.vector_store %arg3[%c1, %c0_3], %11 {strides = array<i32>} : memref<8x128xf32, #tpu.memory_space<vmem>>, vector<1x128xf32>,
    %c2_i32 = arith.constant 2 : i32
    %13 = arith.addi %0, %c2_i32 : i32
    %14 = arith.index_cast %13 : i32 to index
    %15 = memref.load %arg1[%14] : memref<8xi32, #tpu.memory_space<smem>>
    %16 = arith.index_cast %15 : i32 to index
    %c0_4 = arith.constant 0 : index
    %17 = vector.load %arg2[%16, %c0_4] : memref<7x128xf32, #tpu.memory_space<vmem>>, vector<1x128xf32>
    %c2 = arith.constant 2 : index
    %c0_5 = arith.constant 0 : index
    %18 = vector.load %arg3[%c2, %c0_5] : memref<8x128xf32, #tpu.memory_space<vmem>>, vector<1x128xf32>
    tpu.vector_store %arg3[%c2, %c0_5], %17 {strides = array<i32>} : memref<8x128xf32, #tpu.memory_space<vmem>>, vector<1x128xf32>,
    %c3_i32 = arith.constant 3 : i32
    %19 = arith.addi %0, %c3_i32 : i32
    %20 = arith.index_cast %19 : i32 to index
    %21 = memref.load %arg1[%20] : memref<8xi32, #tpu.memory_space<smem>>
    %22 = arith.index_cast %21 : i32 to index
    %c0_6 = arith.constant 0 : index
    %23 = vector.load %arg2[%22, %c0_6] : memref<7x128xf32, #tpu.memory_space<vmem>>, vector<1x128xf32>
    %c3 = arith.constant 3 : index
    %c0_7 = arith.constant 0 : index
    %24 = vector.load %arg3[%c3, %c0_7] : memref<8x128xf32, #tpu.memory_space<vmem>>, vector<1x128xf32>
    tpu.vector_store %arg3[%c3, %c0_7], %23 {strides = array<i32>} : memref<8x128xf32, #tpu.memory_space<vmem>>, vector<1x128xf32>,
    %c4_i32 = arith.constant 4 : i32
    %25 = arith.addi %0, %c4_i32 : i32
    %26 = arith.index_cast %25 : i32 to index
    %27 = memref.load %arg1[%26] : memref<8xi32, #tpu.memory_space<smem>>
    %28 = arith.index_cast %27 : i32 to index
    %c0_8 = arith.constant 0 : index
    %29 = vector.load %arg2[%28, %c0_8] : memref<7x128xf32, #tpu.memory_space<vmem>>, vector<1x128xf32>
    %c4 = arith.constant 4 : index
    %c0_9 = arith.constant 0 : index
    %30 = vector.load %arg3[%c4, %c0_9] : memref<8x128xf32, #tpu.memory_space<vmem>>, vector<1x128xf32>
    tpu.vector_store %arg3[%c4, %c0_9], %29 {strides = array<i32>} : memref<8x128xf32, #tpu.memory_space<vmem>>, vector<1x128xf32>,
    %c5_i32 = arith.constant 5 : i32
    %31 = arith.addi %0, %c5_i32 : i32
    %32 = arith.index_cast %31 : i32 to index
    %33 = memref.load %arg1[%32] : memref<8xi32, #tpu.memory_space<smem>>
    %34 = arith.index_cast %33 : i32 to index
    %c0_10 = arith.constant 0 : index
    %35 = vector.load %arg2[%34, %c0_10] : memref<7x128xf32, #tpu.memory_space<vmem>>, vector<1x128xf32>
    %c5 = arith.constant 5 : index
    %c0_11 = arith.constant 0 : index
    %36 = vector.load %arg3[%c5, %c0_11] : memref<8x128xf32, #tpu.memory_space<vmem>>, vector<1x128xf32>
    tpu.vector_store %arg3[%c5, %c0_11], %35 {strides = array<i32>} : memref<8x128xf32, #tpu.memory_space<vmem>>, vector<1x128xf32>,
    %c6_i32 = arith.constant 6 : i32
    %37 = arith.addi %0, %c6_i32 : i32
    %38 = arith.index_cast %37 : i32 to index
    %39 = memref.load %arg1[%38] : memref<8xi32, #tpu.memory_space<smem>>
    %40 = arith.index_cast %39 : i32 to index
    %c0_12 = arith.constant 0 : index
    %41 = vector.load %arg2[%40, %c0_12] : memref<7x128xf32, #tpu.memory_space<vmem>>, vector<1x128xf32>
    %c6 = arith.constant 6 : index
    %c0_13 = arith.constant 0 : index
    %42 = vector.load %arg3[%c6, %c0_13] : memref<8x128xf32, #tpu.memory_space<vmem>>, vector<1x128xf32>
    tpu.vector_store %arg3[%c6, %c0_13], %41 {strides = array<i32>} : memref<8x128xf32, #tpu.memory_space<vmem>>, vector<1x128xf32>,
    %c7_i32 = arith.constant 7 : i32
    %43 = arith.addi %0, %c7_i32 : i32
    %44 = arith.index_cast %43 : i32 to index
    %45 = memref.load %arg1[%44] : memref<8xi32, #tpu.memory_space<smem>>
    %46 = arith.index_cast %45 : i32 to index
    %c0_14 = arith.constant 0 : index
    %47 = vector.load %arg2[%46, %c0_14] : memref<7x128xf32, #tpu.memory_space<vmem>>, vector<1x128xf32>
    %c7 = arith.constant 7 : index
    %c0_15 = arith.constant 0 : index
    %48 = vector.load %arg3[%c7, %c0_15] : memref<8x128xf32, #tpu.memory_space<vmem>>, vector<1x128xf32>
    tpu.vector_store %arg3[%c7, %c0_15], %47 {strides = array<i32>} : memref<8x128xf32, #tpu.memory_space<vmem>>, vector<1x128xf32>,
    return
  }
  func.func @transform_0(%arg0: i32, %arg1: memref<8xi32, #tpu.memory_space<smem>>) -> (i32, i32) {
    %c0_i32 = arith.constant 0 : i32
    %c0_i32_0 = arith.constant 0 : i32
    %c0_i32_1 = arith.constant 0 : i32
    return %c0_i32, %c0_i32_0 : i32, i32
  }
  func.func @transform_1(%arg0: i32, %arg1: memref<8xi32, #tpu.memory_space<smem>>) -> (i32, i32) {
    %c0_i32 = arith.constant 0 : i32
    %c0_i32_0 = arith.constant 0 : i32
    return %arg0, %c0_i32 : i32, i32
  }
}

</mosaic_0001>

<llo_original>
// kernel: tpu_custom_call.1
$region0: #{tpu_custom_call.1}
  #allocation0 [shape = 'u32[]', space=smem, size = 0x4, offset = 0x4, fixed_abs, tag = 'smem constant byte address 0x4 - core index']
  #allocation1 [shape = 'u32[72,128]{1,0:T(1,128)}', space=vmem, size = 0x9000, scoped, tag = 'internal scratch']
  #allocation2 [shape = 's32[1]{0}', space=sflag, size = 0x4, scoped, tag = 'scoped memory for tpu_custom_call.1']
  #allocation3 [shape = 'u8[512]{0}', space=smem, size = 0x200, scoped, tag = 'prefetched SMEM operand 0']
  %s0 = inlined_call_operand.hbm [shape: s32[8], index: 0, kind: input, shape index: {}]
  %s1 = inlined_call_operand.hbm [shape: f32[7,128], index: 1, kind: input, shape index: {}]
  %s2 = inlined_call_operand.hbm [shape: f32[8,128], index: 2, kind: output, shape index: {}]
  %s3 = sld [smem:[#allocation0]]
  $region18: #{tpu_custom_call.1} parent=0
    _
  %s5 = ssub.s32 1, %s3
  %s6 = scalar_select 0, %s5, %s3
  %s8 = sshll.u32 %s0, 4
  %s9 = int_to_ptr.hbm [resolvable:$true] %s8
  %11 = dma.hbm_to_smem %s9, 16, [#allocation3], [#allocation2]
  %13 = dma.done [#allocation2], 16
  %14 = sfence
  $region1: #{tpu_custom_call.1} parent=0
    #allocation4 [shape = 'u8[4096]{0}', space=vmem, size = 0x1000, scoped, tag = 'input window, operand 1, single buffered']
    #allocation5 [shape = 's32[1]{0}', space=sflag, size = 0x4, scoped, tag = 'scoped memory for tpu_custom_call.1']
    #allocation6 [shape = 's32[1]{0}', space=sflag, size = 0x4, scoped, tag = 'scoped memory for tpu_custom_call.1']
    #allocation7 [shape = 'u8[4096]{0}', space=vmem, size = 0x1000, scoped, tag = 'output window, operand 0, single buffered']
    %15 = vsyncpa [#allocation5], 0
    %16 = vsyncpa [#allocation6], 0
    // Predicated region
    $region2: #{tpu_custom_call.1} parent=1 // pred_check
      _
    $region3: #{tpu_custom_call.1} parent=1 // pred_check_branch
      %18 = sbr.rel (0) target = $region5
    $region4: #{tpu_custom_call.1} parent=1 // pred_region
      %20 = vsyncadd [#allocation5], 0
      %s22 = sshll.u32 %s1, 4
      %s23 = int_to_ptr.hbm [resolvable:$true] %s22
      %s24 = sshll.u32 [#allocation4], 4
      %s25 = int_to_ptr.vmem [resolvable:$true] %s24
      %27 = dma.hbm_to_vmem [thread:$0]  %s23, 128, %s25, [#allocation5]
    $region5: #{tpu_custom_call.1} parent=1 // pred_fallthru
      _
    // Predicated region
    $region6: #{tpu_custom_call.1} parent=1 // pred_check
      _
    $region7: #{tpu_custom_call.1} parent=1 // pred_check_branch
      %29 = sbr.rel (0) target = $region9
    $region8: #{tpu_custom_call.1} parent=1 // pred_region
      %31 = dma.done [#allocation5], 128
    $region9: #{tpu_custom_call.1} parent=1 // pred_fallthru
      _
    %s32 = smul.u32 0, 8
    %s33 = sld [smem:[#allocation3 + %s32]]
    %s34 = scalar_lea.vmem [#allocation4], %s33
    %v35 = vld [vmem:[%s34] sm:$0x1]
    %36 = vst [vmem:[#allocation7] sm:$0x1] %v35
    %s37 = sadd.s32 %s32, 1
    %s38 = sld [smem:[#allocation3 + %s37]]
    %s39 = scalar_lea.vmem [#allocation4], %s38
    %v40 = vld [vmem:[%s39] sm:$0x1]
    %41 = vst [vmem:[#allocation7 + $0x1] sm:$0x1] %v40
    %s42 = sadd.s32 %s32, 2
    %s43 = sld [smem:[#allocation3 + %s42]]
    %s44 = scalar_lea.vmem [#allocation4], %s43
    %v45 = vld [vmem:[%s44] sm:$0x1]
    %46 = vst [vmem:[#allocation7 + $0x2] sm:$0x1] %v45
    %s47 = sadd.s32 %s32, 3
    %s48 = sld [smem:[#allocation3 + %s47]]
    %s49 = scalar_lea.vmem [#allocation4], %s48
    %v50 = vld [vmem:[%s49] sm:$0x1]
    %51 = vst [vmem:[#allocation7 + $0x3] sm:$0x1] %v50
    %s52 = sadd.s32 %s32, 4
    %s53 = sld [smem:[#allocation3 + %s52]]
    %s54 = scalar_lea.vmem [#allocation4], %s53
    %v55 = vld [vmem:[%s54] sm:$0x1]
    %56 = vst [vmem:[#allocation7 + $0x4] sm:$0x1] %v55
    %s57 = sadd.s32 %s32, 5
    %s58 = sld [smem:[#allocation3 + %s57]]
    %s59 = scalar_lea.vmem [#allocation4], %s58
    %v60 = vld [vmem:[%s59] sm:$0x1]
    %61 = vst [vmem:[#allocation7 + $0x5] sm:$0x1] %v60
    %s62 = sadd.s32 %s32, 6
    %s63 = sld [smem:[#allocation3 + %s62]]
    %s64 = scalar_lea.vmem [#allocation4], %s63
    %v65 = vld [vmem:[%s64] sm:$0x1]
    %66 = vst [vmem:[#allocation7 + $0x6] sm:$0x1] %v65
    %s67 = sadd.s32 %s32, 7
    %s68 = sld [smem:[#allocation3 + %s67]]
    %s69 = scalar_lea.vmem [#allocation4], %s68
    %v70 = vld [vmem:[%s69] sm:$0x1]
    %71 = vst [vmem:[#allocation7 + $0x7] sm:$0x1] %v70
    // Predicated region
    $region10: #{tpu_custom_call.1} parent=1 // pred_check
      _
    $region11: #{tpu_custom_call.1} parent=1 // pred_check_branch
      %73 = sbr.rel (0) target = $region13
    $region12: #{tpu_custom_call.1} parent=1 // pred_region
      %75 = vsyncadd [#allocation6], 0
      %s77 = sshll.u32 [#allocation7], 4
      %s78 = int_to_ptr.vmem [resolvable:$true] %s77
      %s79 = sshll.u32 %s2, 4
      %s80 = int_to_ptr.hbm [resolvable:$true] %s79
      %82 = dma.vmem_to_hbm [thread:$0]  %s78, 128, %s80, [#allocation6]
    $region13: #{tpu_custom_call.1} parent=1 // pred_fallthru
      _
    // Predicated region
    $region14: #{tpu_custom_call.1} parent=1 // pred_check
      _
    $region15: #{tpu_custom_call.1} parent=1 // pred_check_branch
      %84 = sbr.rel (0) target = $region17
    $region16: #{tpu_custom_call.1} parent=1 // pred_region
      %86 = dma.done [#allocation6], 128
    $region17: #{tpu_custom_call.1} parent=1 // pred_fallthru
      _
    %87 = vsyncpa [#allocation5], 1
    %88 = vsyncpa [#allocation6], 1

</llo_original>
